<compile_context>
chip_gen: v7x
topology: tpu7x:2x2x1
jax: 0.10.0
libtpu: 0.0.40
codegen_flags: <defaults>
</compile_context>

<pallas_src>
import functools

import jax
import jax.numpy as jnp
from jax import lax
from jax.experimental import pallas as pl
from jax.experimental.pallas import tpu as pltpu


_MiB = 1 << 20
_TK_CANDIDATES = (16384, 8192, 4096, 2048, 1024, 512, 256, 128)


# --------------------------------------------------------------------------
# Tiling / VMEM budgeting helpers (generation-aware)
# --------------------------------------------------------------------------
def _physical_vmem_bytes():
    """Per-core VMEM capacity; conservative fallback (v7x = 64 MiB/core)."""
    try:
        return int(pltpu.get_tpu_info().vmem_capacity_bytes)
    except Exception:
        return 64 * _MiB


def _round_up(x, m):
    return ((x + m - 1) // m) * m


def _pick_tiling(M, Kp, feat_itemsize, fixed_bytes, budget_bytes):
    """Pick (TK, n_buf): largest 128-multiple divisor of Kp whose
    double-buffered footprint (plus the resident gram/target) fits the budget;
    deepen to 3 buffers only if that is free and the K loop is long."""
    tk = 128  # always divides Kp (Kp is padded to a multiple of 128)
    for cand in _TK_CANDIDATES:
        if Kp % cand != 0:
            continue
        if 2 * M * cand * feat_itemsize + fixed_bytes <= budget_bytes:
            tk = cand
            break
    nk = Kp // tk
    n_buf = 2
    if nk > 2 and 3 * M * tk * feat_itemsize + fixed_bytes <= budget_bytes:
        n_buf = 3
    return tk, n_buf


def _plan(M, Kp, feat_itemsize, fixed_bytes, tk, physical):
    budget = int(0.80 * physical)
    if tk is None:
        TK, n_buf = _pick_tiling(M, Kp, feat_itemsize, fixed_bytes, budget)
    else:
        TK = tk
        n_buf = 3 if (Kp // TK > 2 and
                      3 * M * TK * feat_itemsize + fixed_bytes <= budget) else 2
    nk = Kp // TK
    need = n_buf * M * TK * feat_itemsize + fixed_bytes
    vmem_limit = int(min(max(need + 2 * _MiB, 16 * _MiB), int(0.90 * physical)))
    return TK, n_buf, nk, vmem_limit


def _feat_spec(M, TK, n_buf, nk):
    # Deeper buffering only when the K loop is long enough to expose DMA latency.
    if n_buf >= 3 and nk > 2:
        return pl.BlockSpec((M, TK), lambda k: (0, k), pipeline_mode=pl.Buffered(3))
    return pl.BlockSpec((M, TK), lambda k: (0, k))


def _prep_features(x, use_bf16, tk):
    """Reshape to (M, K), optionally cast to bf16 in the wrapper (halves DMA
    bytes), and zero-pad K to a lane-aligned multiple (F @ F^T is unchanged)."""
    b, h, w, c = x.shape
    M, K = b * h, w * c
    feats = x.reshape(M, K)
    if use_bf16:
        feats = feats.astype(jnp.bfloat16)
    Kp = _round_up(K, 128)
    if tk is not None:
        assert tk % 128 == 0, f"tk must be a multiple of 128, got {tk}"
        Kp = _round_up(Kp, tk)
    if Kp != K:
        feats = jnp.pad(feats, ((0, 0), (0, Kp - K)))
    return feats, M, K, Kp


# --------------------------------------------------------------------------
# Kernels
# --------------------------------------------------------------------------
def _gram_kernel(feat_ref, gram_ref, *, inv_div):
    """Accumulates F_k @ F_k^T into the resident (M, M) output block."""
    k = pl.program_id(0)

    @pl.when(k == 0)
    def _():
        gram_ref[...] = jnp.zeros_like(gram_ref)

    f = feat_ref[...]
    # Transpose-free gram: contract the last dim of both operands on the MXU.
    gram_ref[...] += lax.dot_general(
        f, f,
        dimension_numbers=(((1,), (1,)), ((), ())),
        preferred_element_type=jnp.float32,
    )

    @pl.when(k == pl.num_programs(0) - 1)
    def _():
        gram_ref[...] = gram_ref[...] * inv_div


def _style_loss_kernel(feat_ref, target_ref, loss_ref, acc_ref, *, inv_div, inv_n):
    """Loss-only variant: the gram stays in VMEM scratch; only the scalar MSE
    leaves the kernel (through SMEM)."""
    k = pl.program_id(0)

    @pl.when(k == 0)
    def _():
        acc_ref[...] = jnp.zeros_like(acc_ref)

    f = feat_ref[...]
    acc_ref[...] += lax.dot_general(
        f, f,
        dimension_numbers=(((1,), (1,)), ((), ())),
        preferred_element_type=jnp.float32,
    )

    @pl.when(k == pl.num_programs(0) - 1)
    def _():
        g = acc_ref[...] * inv_div
        d = g - target_ref[...].astype(jnp.float32)
        loss_ref[0, 0] = jnp.sum(d * d) * inv_n


# --------------------------------------------------------------------------
# Wrappers
# --------------------------------------------------------------------------
def gram_matrix_pallas(x, *, tk=None, use_bf16=False):
    """Pallas gram matrix, semantics identical to the PyTorch gram_matrix.
    use_bf16=True streams bf16 features (f32 accumulation) — an opt-in
    numerics/tolerance change vs. the f32 reference."""
    b, h, w, c = x.shape
    inv_div = 1.0 / float(b * h * w * c)
    feats, M, K, Kp = _prep_features(x, use_bf16, tk)
    itemsize = jnp.dtype(feats.dtype).itemsize

    physical = _physical_vmem_bytes()
    fixed = 2 * M * M * 4  # resident (M, M) f32 output (double-buffered)
    TK, n_buf, nk, vmem_limit = _plan(M, Kp, itemsize, fixed, tk, physical)

    cost = pl.CostEstimate(
        flops=2 * M * M * Kp,
        transcendentals=0,
        bytes_accessed=M * Kp * itemsize + M * M * 4,
    )

    return pl.pallas_call(
        functools.partial(_gram_kernel, inv_div=inv_div),
        out_shape=jax.ShapeDtypeStruct((M, M), jnp.float32),
        grid=(nk,),
        in_specs=[_feat_spec(M, TK, n_buf, nk)],
        out_specs=pl.BlockSpec((M, M), lambda k: (0, 0)),
        compiler_params=pltpu.CompilerParams(
            dimension_semantics=("arbitrary",),
            vmem_limit_bytes=vmem_limit,
        ),
        cost_estimate=cost,
    )(feats)


def style_loss_pallas(x, target_gram, *, tk=None, use_bf16=False):
    """Returns the scalar mse_loss(gram_matrix(x), target_gram).

    The gram matrix is never written back to HBM; it is accumulated in a VMEM
    scratch buffer and reduced to a single SMEM scalar in the last K step."""
    b, h, w, c = x.shape
    inv_div = 1.0 / float(b * h * w * c)
    feats, M, K, Kp = _prep_features(x, use_bf16, tk)
    inv_n = 1.0 / float(M * M)
    itemsize = jnp.dtype(feats.dtype).itemsize

    physical = _physical_vmem_bytes()
    # Resident target block (double-buffered) + f32 gram accumulator scratch.
    fixed = 3 * M * M * 4
    TK, n_buf, nk, vmem_limit = _plan(M, Kp, itemsize, fixed, tk, physical)

    cost = pl.CostEstimate(
        flops=2 * M * M * Kp,
        transcendentals=0,
        bytes_accessed=M * Kp * itemsize + M * M * 4 + 4,
    )

    loss = pl.pallas_call(
        functools.partial(_style_loss_kernel, inv_div=inv_div, inv_n=inv_n),
        out_shape=jax.ShapeDtypeStruct((1, 1), jnp.float32),
        grid=(nk,),
        in_specs=[
            _feat_spec(M, TK, n_buf, nk),
            pl.BlockSpec((M, M), lambda k: (0, 0)),  # target: fetched once, resident
        ],
        out_specs=pl.BlockSpec(memory_space=pltpu.MemorySpace.SMEM),
        scratch_shapes=[pltpu.VMEM((M, M), jnp.float32)],  # gram accumulator
        compiler_params=pltpu.CompilerParams(
            dimension_semantics=("arbitrary",),
            vmem_limit_bytes=vmem_limit,
        ),
        cost_estimate=cost,
    )(feats, target_gram)
    return loss[0, 0]


class StyleLoss:
    """JAX/Pallas port of the PyTorch StyleLoss module.

    Note: `self.loss` is Python-side state (like the PyTorch module); it is not
    jit-friendly — call `style_loss_pallas` directly inside jitted code."""

    def __init__(self, target_feature, *, use_bf16=False):
        self.use_bf16 = use_bf16
        # target is the (detached) gram matrix of the target feature map.
        self.target = gram_matrix_pallas(target_feature, use_bf16=use_bf16)
        self.loss = jnp.float32(0.0)  # F.mse_loss(target, target) == 0

    def __call__(self, x):
        self.loss = style_loss_pallas(x, self.target, use_bf16=self.use_bf16)
        return x  # forward returns its input unchanged


# --------------------------------------------------------------------------
# Demo / correctness check
# --------------------------------------------------------------------------
def _ref_gram(x):
    b, h, w, c = x.shape
    f = x.reshape(b * h, w * c).astype(jnp.float32)
    return (f @ f.T) / (b * h * w * c)


if __name__ == "__main__":
    key = jax.random.PRNGKey(0)
    k1, k2, k3, k4, k5, k6 = jax.random.split(key, 6)

    # (batch, h, w, f_map_num) per the reference code's axis convention.
    target_feature = jax.random.normal(k1, (2, 4, 16, 16), dtype=jnp.float32)
    x = jax.random.normal(k2, (2, 4, 16, 16), dtype=jnp.float32)

    layer = StyleLoss(target_feature)
    out = layer(x)
    jax.block_until_ready((out, layer.loss))

    ref_loss = jnp.mean((_ref_gram(x) - _ref_gram(target_feature)) ** 2)
    assert jnp.allclose(out, x), "forward must return its input unchanged"
    assert jnp.allclose(layer.loss, ref_loss, rtol=1e-4, atol=1e-6), (
        layer.loss, ref_loss)

    # Gram matrix itself (used for the target in __init__).
    g = gram_matrix_pallas(x)
    assert jnp.allclose(g, _ref_gram(x), rtol=1e-5, atol=1e-5)

    # Force the multi-step K-tiled accumulation path (K=256 -> 2 steps).
    loss_tiled = style_loss_pallas(x, layer.target, tk=128)
    jax.block_until_ready(loss_tiled)
    assert jnp.allclose(loss_tiled, ref_loss, rtol=1e-4, atol=1e-6), (
        loss_tiled, ref_loss)

    # Larger shape exercising the deep-buffered path (K=512, tk=128 -> 4 steps,
    # Buffered(3)).
    tf2 = jax.random.normal(k3, (2, 8, 16, 32), dtype=jnp.float32)
    x2 = jax.random.normal(k4, (2, 8, 16, 32), dtype=jnp.float32)
    layer2 = StyleLoss(tf2)
    out2 = layer2(x2)
    loss2_tiled = style_loss_pallas(x2, layer2.target, tk=128)
    jax.block_until_ready((out2, layer2.loss, loss2_tiled))
    ref_loss2 = jnp.mean((_ref_gram(x2) - _ref_gram(tf2)) ** 2)
    assert jnp.allclose(out2, x2)
    assert jnp.allclose(layer2.loss, ref_loss2, rtol=1e-4, atol=1e-6), (
        layer2.loss, ref_loss2)
    assert jnp.allclose(loss2_tiled, ref_loss2, rtol=1e-4, atol=1e-6), (
        loss2_tiled, ref_loss2)

    # K not divisible by 128 (w*c = 160) -> zero-padded to 256 in the wrapper.
    tf3 = jax.random.normal(k5, (2, 4, 16, 10), dtype=jnp.float32)
    x3 = jax.random.normal(k6, (2, 4, 16, 10), dtype=jnp.float32)
    layer3 = StyleLoss(tf3)
    out3 = layer3(x3)
    jax.block_until_ready((out3, layer3.loss))
    ref_loss3 = jnp.mean((_ref_gram(x3) - _ref_gram(tf3)) ** 2)
    assert jnp.allclose(out3, x3)
    assert jnp.allclose(layer3.loss, ref_loss3, rtol=1e-4, atol=1e-6), (
        layer3.loss, ref_loss3)
    assert jnp.allclose(gram_matrix_pallas(x3), _ref_gram(x3), rtol=1e-5, atol=1e-5)

    # Opt-in bf16 streaming path (numerics intentionally looser than f32 ref);
    # just make sure it compiles/runs and produces finite values.
    g_bf16 = gram_matrix_pallas(x, use_bf16=True)
    loss_bf16 = style_loss_pallas(x, layer.target, use_bf16=True)
    jax.block_until_ready((g_bf16, loss_bf16))
    assert bool(jnp.all(jnp.isfinite(g_bf16))) and bool(jnp.isfinite(loss_bf16))

    print("KERNEL_OK")
</pallas_src>

<mosaic_0001>
module attributes {stable_mosaic.version = 11 : i64} {
  func.func @_gram_kernel(%arg0: i32, %arg1: memref<8x256xf32, #tpu.memory_space<vmem>>, %arg2: memref<8x8xf32, #tpu.memory_space<vmem>>) attributes {dimension_semantics = [#tpu.dimension_semantics<arbitrary>], iteration_bounds = array<i64: 1>, scalar_prefetch = 0 : i64, scratch_operands = 0 : i64, tpu.core_type = #tpu.core_type<tc>, window_params = [{transform_indices = @transform_0, window_bounds = array<i64: 8, 256>}, {pipeline_mode = #tpu.pipeline_mode<synchronous>, transform_indices = @transform_1, window_bounds = array<i64: 8, 8>}]} {
    %c0_i32 = arith.constant 0 : i32
    %0 = arith.cmpi eq, %arg0, %c0_i32 : i32
    %1 = arith.extui %0 : i1 to i32
    %c0_i32_0 = arith.constant 0 : i32
    %2 = arith.cmpi ne, %1, %c0_i32_0 : i32
    scf.if %2 {
      %cst_8 = arith.constant 0.000000e+00 : f32
      %11 = vector.broadcast %cst_8 : f32 to vector<8x8xf32>
      %c0_9 = arith.constant 0 : index
      %c0_10 = arith.constant 0 : index
      %12 = vector.load %arg2[%c0_9, %c0_10] : memref<8x8xf32, #tpu.memory_space<vmem>>, vector<8x8xf32>
      tpu.vector_store %arg2[%c0_9, %c0_10], %11 {strides = array<i32>} : memref<8x8xf32, #tpu.memory_space<vmem>>, vector<8x8xf32>,
    } else {
    }
    %c0 = arith.constant 0 : index
    %c0_1 = arith.constant 0 : index
    %3 = vector.load %arg1[%c0, %c0_1] : memref<8x256xf32, #tpu.memory_space<vmem>>, vector<8x256xf32>
    %c0_2 = arith.constant 0 : index
    %c0_3 = arith.constant 0 : index
    %4 = vector.load %arg2[%c0_2, %c0_3] : memref<8x8xf32, #tpu.memory_space<vmem>>, vector<8x8xf32>
    %cst = arith.constant dense<0.000000e+00> : vector<8x8xf32>
    %5 = tpu.matmul %3, %3, %cst {dimension_numbers = #tpu.dot_dimension_numbers<[1], [1], [0], [0], [0, 0, 1, 0], [], []>} : vector<8x256xf32>, vector<8x256xf32>, vector<8x8xf32> -> vector<8x8xf32>
    %6 = arith.addf %4, %5 : vector<8x8xf32>
    %c0_4 = arith.constant 0 : index
    %c0_5 = arith.constant 0 : index
    %7 = vector.load %arg2[%c0_4, %c0_5] : memref<8x8xf32, #tpu.memory_space<vmem>>, vector<8x8xf32>
    tpu.vector_store %arg2[%c0_4, %c0_5], %6 {strides = array<i32>} : memref<8x8xf32, #tpu.memory_space<vmem>>, vector<8x8xf32>,
    %c0_i32_6 = arith.constant 0 : i32
    %8 = arith.cmpi eq, %arg0, %c0_i32_6 : i32
    %9 = arith.extui %8 : i1 to i32
    %c0_i32_7 = arith.constant 0 : i32
    %10 = arith.cmpi ne, %9, %c0_i32_7 : i32
    scf.if %10 {
      %c0_8 = arith.constant 0 : index
      %c0_9 = arith.constant 0 : index
      %11 = vector.load %arg2[%c0_8, %c0_9] : memref<8x8xf32, #tpu.memory_space<vmem>>, vector<8x8xf32>
      %cst_10 = arith.constant 4.8828125E-4 : f32
      %12 = vector.broadcast %cst_10 : f32 to vector<8x8xf32>
      %13 = arith.mulf %11, %12 : vector<8x8xf32>
      %c0_11 = arith.constant 0 : index
      %c0_12 = arith.constant 0 : index
      %14 = vector.load %arg2[%c0_11, %c0_12] : memref<8x8xf32, #tpu.memory_space<vmem>>, vector<8x8xf32>
      tpu.vector_store %arg2[%c0_11, %c0_12], %13 {strides = array<i32>} : memref<8x8xf32, #tpu.memory_space<vmem>>, vector<8x8xf32>,
    } else {
    }
    return
  }
  func.func @transform_0(%arg0: i32) -> (i32, i32) {
    %c0_i32 = arith.constant 0 : i32
    %c0_i32_0 = arith.constant 0 : i32
    return %c0_i32, %arg0 : i32, i32
  }
  func.func @transform_1(%arg0: i32) -> (i32, i32) {
    %c0_i32 = arith.constant 0 : i32
    %c0_i32_0 = arith.constant 0 : i32
    %c0_i32_1 = arith.constant 0 : i32
    return %c0_i32, %c0_i32_0 : i32, i32
  }
}

</mosaic_0001>

<llo_original>
// kernel: tpu_custom_call.1
$region0: #{tpu_custom_call.1}
  #allocation0 [shape = 'u32[]', space=smem, size = 0x4, offset = 0x4, fixed_abs, tag = 'smem constant byte address 0x4 - core index']
  #allocation1 [shape = 'u32[144,128]{1,0:T(1,128)}', space=vmem, size = 0x12000, scoped, tag = 'internal scratch']
  %s0 = inlined_call_operand.hbm [shape: f32[8,256], index: 0, kind: input, shape index: {}]
  %s1 = inlined_call_operand.hbm [shape: f32[8,8], index: 1, kind: output, shape index: {}]
  %s2 = sld [smem:[#allocation0]]
  $region26: #{tpu_custom_call.1} parent=0
    _
  %s4 = ssub.s32 1, %s2
  %s5 = scalar_select 0, %s4, %s2
  $region1: #{tpu_custom_call.1} parent=0
    #allocation2 [shape = 'u8[8192]{0}', space=vmem, size = 0x2000, scoped, tag = 'input window, operand 0, single buffered']
    #allocation3 [shape = 's32[1]{0}', space=sflag, size = 0x4, scoped, tag = 'scoped memory for tpu_custom_call.1']
    #allocation4 [shape = 's32[1]{0}', space=sflag, size = 0x4, scoped, tag = 'scoped memory for tpu_custom_call.1']
    #allocation5 [shape = 'u8[4096]{0}', space=vmem, size = 0x1000, scoped, tag = 'output window, operand 0, single buffered']
    %6 = vsyncpa [#allocation3], 0
    %7 = vsyncpa [#allocation4], 0
    // Predicated region
    $region2: #{tpu_custom_call.1} parent=1 // pred_check
      _
    $region3: #{tpu_custom_call.1} parent=1 // pred_check_branch
      %9 = sbr.rel (0) target = $region5
    $region4: #{tpu_custom_call.1} parent=1 // pred_region
      %s11 = ssub.s32 256, 256
      %12 = vsyncadd [#allocation3], %s11
      %s14 = sshll.u32 [#allocation2], 4
      %s15 = int_to_ptr.vmem [resolvable:$true] %s14
      %17 = dma.hbm_to_vmem [thread:$0]  %s0, 256, %s15, [#allocation3]
    $region5: #{tpu_custom_call.1} parent=1 // pred_fallthru
      _
    // Predicated region
    $region6: #{tpu_custom_call.1} parent=1 // pred_check
      _
    $region7: #{tpu_custom_call.1} parent=1 // pred_check_branch
      %19 = sbr.rel (0) target = $region9
    $region8: #{tpu_custom_call.1} parent=1 // pred_region
      %20 = dma.done [#allocation3], 256
    $region9: #{tpu_custom_call.1} parent=1 // pred_fallthru
      _
    %p21 = scmp.eq.s32.totalorder 0, 0
    // Predicated region
    $region10: #{tpu_custom_call.1} parent=1 // pred_check
      %p22 = pneg %p21
    $region11: #{tpu_custom_call.1} parent=1 // pred_check_branch
      %24 = sbr.rel (%p22) target = $region13
    $region12: #{tpu_custom_call.1} parent=1 // pred_region
      %vm25 = vcmask 64512
      %26 = vst.msk [vmem:[#allocation5] sm:$0xff] %vm25, 0.0
    $region13: #{tpu_custom_call.1} parent=1 // pred_fallthru
      _
    %v27 = vld [vmem:[#allocation2] sm:$0xff]
    %v28 = vld [vmem:[#allocation2 + $0x8] sm:$0xff]
    %v29 = vld [vmem:[#allocation5] sm:$0xff]
    %30 = vmatprep.subr.mxu0 %v28
    %31 = vmatpush1.xpose.msra.mxu0 %v27
    %32 = vmatprep.subr.mxu0 0.0
    %33 = vmatpush1.xpose.msra.mxu0 0.0
    %34 = vmatprep.subr.mxu0 0.0
    %35 = vmatpush1.xpose.msra.mxu0 0.0
    %36 = vmatprep.subr.mxu0 0.0
    %37 = vmatpush1.xpose.msra.mxu0 0.0
    %38 = vmatprep.subr.mxu0 0.0
    %39 = vmatpush1.xpose.msra.mxu0 0.0
    %40 = vmatprep.subr.mxu0 0.0
    %41 = vmatpush1.xpose.msra.mxu0 0.0
    %42 = vmatprep.subr.mxu0 0.0
    %43 = vmatpush1.xpose.msra.mxu0 0.0
    %44 = vmatprep.subr.mxu0 0.0
    %45 = vmatpush1.xpose.msra.mxu0 0.0
    %46 = vmatprep.subr.mxu0 0.0
    %47 = vmatpush1.xpose.msra.mxu0 0.0
    %48 = vmatprep.subr.mxu0 0.0
    %49 = vmatpush1.xpose.msra.mxu0 0.0
    %50 = vmatprep.subr.mxu0 0.0
    %51 = vmatpush1.xpose.msra.mxu0 0.0
    %52 = vmatprep.subr.mxu0 0.0
    %53 = vmatpush1.xpose.msra.mxu0 0.0
    %54 = vmatprep.subr.mxu0 0.0
    %55 = vmatpush1.xpose.msra.mxu0 0.0
    %56 = vmatprep.subr.mxu0 0.0
    %57 = vmatpush1.xpose.msra.mxu0 0.0
    %58 = vmatprep.subr.mxu0 0.0
    %59 = vmatpush1.xpose.msra.mxu0 0.0
    %60 = vmatprep.subr.mxu0 0.0
    %61 = vmatpush1.xpose.msra.mxu0 0.0
    %62 = vmatprep.subr.mxu0 0.0
    %63 = vmatpush1.xpose.msra.mxu0 0.0
    %64 = vmatprep.subr.mxu0 0.0
    %65 = vmatpush1.xpose.msra.mxu0 0.0
    %66 = vmatprep.subr.mxu0 0.0
    %67 = vmatpush1.xpose.msra.mxu0 0.0
    %68 = vmatprep.subr.mxu0 0.0
    %69 = vmatpush1.xpose.msra.mxu0 0.0
    %70 = vmatprep.subr.mxu0 0.0
    %71 = vmatpush1.xpose.msra.mxu0 0.0
    %72 = vmatprep.subr.mxu0 0.0
    %73 = vmatpush1.xpose.msra.mxu0 0.0
    %74 = vmatprep.subr.mxu0 0.0
    %75 = vmatpush1.xpose.msra.mxu0 0.0
    %76 = vmatprep.subr.mxu0 0.0
    %77 = vmatpush1.xpose.msra.mxu0 0.0
    %78 = vmatprep.subr.mxu0 0.0
    %79 = vmatpush1.xpose.msra.mxu0 0.0
    %80 = vmatprep.subr.mxu0 0.0
    %81 = vmatpush1.xpose.msra.mxu0 0.0
    %82 = vmatprep.subr.mxu0 0.0
    %83 = vmatpush1.xpose.msra.mxu0 0.0
    %84 = vmatprep.subr.mxu0 0.0
    %85 = vmatpush1.xpose.msra.mxu0 0.0
    %86 = vmatprep.subr.mxu0 0.0
    %87 = vmatpush1.xpose.msra.mxu0 0.0
    %88 = vmatprep.subr.mxu0 0.0
    %89 = vmatpush1.xpose.msra.mxu0 0.0
    %90 = vmatprep.subr.mxu0 0.0
    %91 = vmatpush1.xpose.msra.mxu0 0.0
    %92 = vmatprep.subr.mxu0 0.0
    %93 = vmatpush1.xpose.msra.mxu0 0.0
    %94 = vmatprep.mubr.f32.mxu0 %v28
    %95 = vmatmul.mubr.f32.gmra.mrb[0].mxu0 %v27
    %v96 = vpop.f32.mrb[0].mxu0
    %v97 = vadd.f32 0.0, %v96
    %v98 = vpop.f32.mrb[0].mxu0
    %99 = vdwg.mxu0
    %v100 = vadd.f32 %v29, %v97
    %vm101 = vcmask 64512
    %102 = vst.msk [vmem:[#allocation5] sm:$0xff] %vm101, %v100
    // Predicated region
    $region14: #{tpu_custom_call.1} parent=1 // pred_check
      %p103 = pneg %p21
    $region15: #{tpu_custom_call.1} parent=1 // pred_check_branch
      %105 = sbr.rel (%p103) target = $region17
    $region16: #{tpu_custom_call.1} parent=1 // pred_region
      %v106 = vld [vmem:[#allocation5] sm:$0xff]
      %v107 = vmul.f32 %v106, 0.00048828125
      %108 = vst.msk [vmem:[#allocation5] sm:$0xff] %vm101, %v107
    $region17: #{tpu_custom_call.1} parent=1 // pred_fallthru
      _
    // Predicated region
    $region18: #{tpu_custom_call.1} parent=1 // pred_check
      _
    $region19: #{tpu_custom_call.1} parent=1 // pred_check_branch
      %110 = sbr.rel (0) target = $region21
    $region20: #{tpu_custom_call.1} parent=1 // pred_region
      %s112 = ssub.s32 128, 128
      %113 = vsyncadd [#allocation4], %s112
      %s115 = sshll.u32 [#allocation5], 4
      %s116 = int_to_ptr.vmem [resolvable:$true] %s115
      %118 = dma.vmem_to_hbm [thread:$0]  %s116, 128, %s1, [#allocation4]
    $region21: #{tpu_custom_call.1} parent=1 // pred_fallthru
      _
    // Predicated region
    $region22: #{tpu_custom_call.1} parent=1 // pred_check
      _
    $region23: #{tpu_custom_call.1} parent=1 // pred_check_branch
      %120 = sbr.rel (0) target = $region25
    $region24: #{tpu_custom_call.1} parent=1 // pred_region
      %121 = dma.done [#allocation4], 128
    $region25: #{tpu_custom_call.1} parent=1 // pred_fallthru
      _
    %122 = vsyncpa [#allocation3], 1
    %123 = vsyncpa [#allocation4], 1

</llo_original>
